<compile_context>
chip_gen: v7x
topology: tpu7x:2x2x1
jax: 0.10.0
libtpu: 0.0.40
codegen_flags: <defaults>
</compile_context>

<pallas_src>
import jax
import jax.numpy as jnp
from jax.experimental import pallas as pl
from jax.experimental.pallas import tpu as pltpu


# ---------------------------------------------------------------------------
# Kernel: one whole image per grid step, three Toeplitz matmuls.
# ---------------------------------------------------------------------------
def _overlap_patch_embed_kernel(x_ref, w_ref, o_ref, acc_ref):
    # x_ref:   (1, H, W*Cin)       lane-packed NHWC rows of one image
    # w_ref:   (3, W*Cin, W*Cout)  block-Toeplitz weights, one matrix per kh
    # o_ref:   (1, H, W*Cout)      lane-dense output rows
    # acc_ref: VMEM (H, W*Cout)    f32 accumulator scratch
    x = x_ref[0]                    # (H, W*Cin)
    H = x.shape[0]

    # kh = 1 (center row of the 3x3 kernel): output row h <- input row h.
    acc_ref[...] = jnp.dot(x, w_ref[1], preferred_element_type=jnp.float32)

    if H > 1:
        # kh = 0 (top): output row h <- input row h-1 (row 0 sees the zero pad).
        y_top = jnp.dot(x, w_ref[0], preferred_element_type=jnp.float32)
        acc_ref[1:, :] += y_top[:-1, :]
        # kh = 2 (bottom): output row h <- input row h+1 (last row sees the pad).
        y_bot = jnp.dot(x, w_ref[2], preferred_element_type=jnp.float32)
        acc_ref[:-1, :] += y_bot[1:, :]

    o_ref[0] = acc_ref[...].astype(o_ref.dtype)


# ---------------------------------------------------------------------------
# Wrapper-side weight packing and VMEM budgeting.
# ---------------------------------------------------------------------------
def _pack_toeplitz_weights(weight_oihw, W, dtype):
    """(Cout, Cin, 3, 3) -> (3, W*Cin, W*Cout) block-Toeplitz RHS.

    T[kh, wi*Cin + ci, wo*Cout + co] = weight[co, ci, kh, kw] with wi = wo+kw-1;
    taps with wi outside [0, W) are simply absent, which implements the
    width-wise zero padding.
    """
    Cout, Cin, KH, KW = weight_oihw.shape
    assert (KH, KW) == (3, 3), "OverlapPatchEmbed uses a 3x3 kernel"
    w = jnp.transpose(weight_oihw, (2, 3, 1, 0)).astype(jnp.float32)  # (kh,kw,ci,co)
    mats = []
    for kh in range(3):
        t = jnp.zeros((W, Cin, W, Cout), jnp.float32)
        for kw in range(3):
            sel = jnp.eye(W, W, k=1 - kw, dtype=jnp.float32)          # [wi, wo]
            t = t + jnp.einsum("ij,cd->icjd", sel, w[kh, kw])
        mats.append(t.reshape(W * Cin, W * Cout))
    return jnp.stack(mats, axis=0).astype(dtype)


def _ceil_to(x, m):
    return (x + m - 1) // m * m


def _tile_padded_bytes(shape, dtype):
    """Bytes of a VMEM block after padding its last two dims to the min tile."""
    itemsize = jnp.dtype(dtype).itemsize
    sublane = max(8, (8 * 4) // itemsize)   # f32: 8, bf16: 16, int8/fp8: 32
    s = list(shape)
    s[-1] = _ceil_to(s[-1], 128)
    if len(s) >= 2:
        s[-2] = _ceil_to(s[-2], sublane)
    n = 1
    for d in s:
        n *= d
    return n * itemsize


_FLEET_MIN_SCOPED_VMEM = 16 << 20   # v5e default scoped VMEM (true fleet minimum)
_MAX_VMEM_REQUEST = 56 << 20        # stay under v7x's 64 MiB physical VMEM


# ---------------------------------------------------------------------------
# Public entry point (matches OverlapPatchEmbed.forward semantics).
# ---------------------------------------------------------------------------
def overlap_patch_embed(x_nchw, weight_oihw, *, out_format="NCHW"):
    """Conv2d(in_c, embed_dim, kernel_size=3, stride=1, padding=1, bias=False).

    x_nchw:      (B, Cin, H, W)     PyTorch NCHW convention
    weight_oihw: (Cout, Cin, 3, 3)  PyTorch Conv2d weight layout
    out_format:  "NCHW" (default, matches the module), "NHWC", or
                 "NHWC_FLAT" ((B, H, W*Cout) lane-dense, no output transpose).
    """
    B, Cin, H, W = x_nchw.shape
    Cout = weight_oihw.shape[0]
    dt = x_nchw.dtype
    itemsize = jnp.dtype(dt).itemsize

    # --- layout glue (the only wrapper HBM passes: one transpose in/out) -----
    x_flat = jnp.transpose(x_nchw, (0, 2, 3, 1)).reshape(B, H, W * Cin)
    w_toep = _pack_toeplitz_weights(weight_oihw, W, dt)        # (3, W*Cin, W*Cout)

    # --- VMEM budget check (double-buffered in/out/weights + f32 accumulator) -
    in_b = _tile_padded_bytes((H, W * Cin), dt)
    out_b = _tile_padded_bytes((H, W * Cout), dt)
    w_b = 3 * _tile_padded_bytes((W * Cin, W * Cout), dt)
    acc_b = _tile_padded_bytes((H, W * Cout), jnp.float32)
    est = 2 * (in_b + out_b + w_b) + acc_b
    if est > _MAX_VMEM_REQUEST:
        # TODO(synk): add width/row tiling (manual halo DMA) for very large H/W.
        raise NotImplementedError(
            f"whole-image block needs ~{est >> 20} MiB VMEM; width/row tiling "
            "for very large images is not implemented")
    compiler_kwargs = dict(dimension_semantics=("parallel",))
    if est > (_FLEET_MIN_SCOPED_VMEM * 3) // 4:
        compiler_kwargs["vmem_limit_bytes"] = min(_MAX_VMEM_REQUEST, est + (4 << 20))

    flops = 2 * B * H * (W * Cin) * (W * Cout) * 3
    bytes_accessed = int((x_flat.size + w_toep.size + B * H * W * Cout) * itemsize)

    out_flat = pl.pallas_call(
        _overlap_patch_embed_kernel,
        out_shape=jax.ShapeDtypeStruct((B, H, W * Cout), dt),
        grid=(B,),
        in_specs=[
            pl.BlockSpec((1, H, W * Cin), lambda b: (b, 0, 0)),
            pl.BlockSpec((3, W * Cin, W * Cout), lambda b: (0, 0, 0)),
        ],
        out_specs=pl.BlockSpec((1, H, W * Cout), lambda b: (b, 0, 0)),
        scratch_shapes=[pltpu.VMEM((H, W * Cout), jnp.float32)],
        compiler_params=pltpu.CompilerParams(**compiler_kwargs),
        cost_estimate=pl.CostEstimate(
            flops=flops, transcendentals=0, bytes_accessed=bytes_accessed),
    )(x_flat, w_toep)

    if out_format == "NHWC_FLAT":
        return out_flat
    out_nhwc = out_flat.reshape(B, H, W, Cout)
    if out_format == "NHWC":
        return out_nhwc
    return jnp.transpose(out_nhwc, (0, 3, 1, 2))               # (B, Cout, H, W)


if __name__ == "__main__":
    # Small shapes consistent with the module: batch=2, in_c=4, H=W=16, embed_dim=32.
    B, Cin, H, W, Cout = 2, 4, 16, 16, 32

    key = jax.random.PRNGKey(0)
    kx, kw = jax.random.split(key)
    x = jax.random.normal(kx, (B, Cin, H, W), dtype=jnp.float32)
    weight = jax.random.normal(kw, (Cout, Cin, 3, 3), dtype=jnp.float32) * 0.1

    out = overlap_patch_embed(x, weight)
    out = jax.block_until_ready(out)

    # Reference: XLA convolution with identical semantics (SAME padding, stride 1).
    ref = jax.lax.conv_general_dilated(
        x, weight, window_strides=(1, 1), padding="SAME",
        dimension_numbers=("NCHW", "OIHW", "NCHW"))
    assert out.shape == (B, Cout, H, W)
    assert jnp.allclose(out, ref, atol=1e-3, rtol=1e-3), "mismatch vs reference conv"

    print("KERNEL_OK")
</pallas_src>

<mosaic_0001>
module attributes {stable_mosaic.version = 11 : i64} {
  func.func @_overlap_patch_embed_kernel(%arg0: i32, %arg1: memref<1x16x64xf32, #tpu.memory_space<vmem>>, %arg2: memref<3x64x512xf32, #tpu.memory_space<vmem>>, %arg3: memref<1x16x512xf32, #tpu.memory_space<vmem>>, %arg4: memref<16x512xf32, #tpu.memory_space<vmem>>) attributes {dimension_semantics = [#tpu.dimension_semantics<parallel>], iteration_bounds = array<i64: 2>, scalar_prefetch = 0 : i64, scratch_operands = 1 : i64, tpu.core_type = #tpu.core_type<tc>, window_params = [{transform_indices = @transform_0, window_bounds = array<i64: 1, 16, 64>}, {pipeline_mode = #tpu.pipeline_mode<synchronous>, transform_indices = @transform_1, window_bounds = array<i64: 3, 64, 512>}, {transform_indices = @transform_2, window_bounds = array<i64: 1, 16, 512>}]} {
    %c0 = arith.constant 0 : index
    %c0_0 = arith.constant 0 : index
    %c0_1 = arith.constant 0 : index
    %0 = vector.load %arg1[%c0, %c0_0, %c0_1] : memref<1x16x64xf32, #tpu.memory_space<vmem>>, vector<1x16x64xf32>
    %1 = vector.shape_cast %0 : vector<1x16x64xf32> to vector<16x64xf32>
    %c1 = arith.constant 1 : index
    %c0_2 = arith.constant 0 : index
    %c0_3 = arith.constant 0 : index
    %2 = vector.load %arg2[%c1, %c0_2, %c0_3] : memref<3x64x512xf32, #tpu.memory_space<vmem>>, vector<1x64x512xf32>
    %3 = vector.shape_cast %2 : vector<1x64x512xf32> to vector<64x512xf32>
    %cst = arith.constant dense<0.000000e+00> : vector<16x512xf32>
    %4 = tpu.matmul %1, %3, %cst {dimension_numbers = #tpu.dot_dimension_numbers<[1], [0], [0], [1], [0, 0, 1, 1], [], []>} : vector<16x64xf32>, vector<64x512xf32>, vector<16x512xf32> -> vector<16x512xf32>
    %c0_4 = arith.constant 0 : index
    %c0_5 = arith.constant 0 : index
    %5 = vector.load %arg4[%c0_4, %c0_5] : memref<16x512xf32, #tpu.memory_space<vmem>>, vector<16x512xf32>
    tpu.vector_store %arg4[%c0_4, %c0_5], %4 {strides = array<i32>} : memref<16x512xf32, #tpu.memory_space<vmem>>, vector<16x512xf32>,
    %c0_6 = arith.constant 0 : index
    %c0_7 = arith.constant 0 : index
    %c0_8 = arith.constant 0 : index
    %6 = vector.load %arg2[%c0_6, %c0_7, %c0_8] : memref<3x64x512xf32, #tpu.memory_space<vmem>>, vector<1x64x512xf32>
    %7 = vector.shape_cast %6 : vector<1x64x512xf32> to vector<64x512xf32>
    %cst_9 = arith.constant dense<0.000000e+00> : vector<16x512xf32>
    %8 = tpu.matmul %1, %7, %cst_9 {dimension_numbers = #tpu.dot_dimension_numbers<[1], [0], [0], [1], [0, 0, 1, 1], [], []>} : vector<16x64xf32>, vector<64x512xf32>, vector<16x512xf32> -> vector<16x512xf32>
    %c1_10 = arith.constant 1 : index
    %c0_11 = arith.constant 0 : index
    %9 = vector.load %arg4[%c1_10, %c0_11] : memref<16x512xf32, #tpu.memory_space<vmem>>, vector<15x512xf32>
    %10 = vector.extract_strided_slice %8 {offsets = [0, 0], sizes = [15, 512], strides = [1, 1]} : vector<16x512xf32> to vector<15x512xf32>
    %11 = arith.addf %9, %10 : vector<15x512xf32>
    %c1_12 = arith.constant 1 : index
    %c0_13 = arith.constant 0 : index
    %12 = vector.load %arg4[%c1_12, %c0_13] : memref<16x512xf32, #tpu.memory_space<vmem>>, vector<15x512xf32>
    tpu.vector_store %arg4[%c1_12, %c0_13], %11 {strides = array<i32>} : memref<16x512xf32, #tpu.memory_space<vmem>>, vector<15x512xf32>,
    %c2 = arith.constant 2 : index
    %c0_14 = arith.constant 0 : index
    %c0_15 = arith.constant 0 : index
    %13 = vector.load %arg2[%c2, %c0_14, %c0_15] : memref<3x64x512xf32, #tpu.memory_space<vmem>>, vector<1x64x512xf32>
    %14 = vector.shape_cast %13 : vector<1x64x512xf32> to vector<64x512xf32>
    %cst_16 = arith.constant dense<0.000000e+00> : vector<16x512xf32>
    %15 = tpu.matmul %1, %14, %cst_16 {dimension_numbers = #tpu.dot_dimension_numbers<[1], [0], [0], [1], [0, 0, 1, 1], [], []>} : vector<16x64xf32>, vector<64x512xf32>, vector<16x512xf32> -> vector<16x512xf32>
    %c0_17 = arith.constant 0 : index
    %c0_18 = arith.constant 0 : index
    %16 = vector.load %arg4[%c0_17, %c0_18] : memref<16x512xf32, #tpu.memory_space<vmem>>, vector<15x512xf32>
    %17 = vector.extract_strided_slice %15 {offsets = [1, 0], sizes = [15, 512], strides = [1, 1]} : vector<16x512xf32> to vector<15x512xf32>
    %18 = arith.addf %16, %17 : vector<15x512xf32>
    %c0_19 = arith.constant 0 : index
    %c0_20 = arith.constant 0 : index
    %19 = vector.load %arg4[%c0_19, %c0_20] : memref<16x512xf32, #tpu.memory_space<vmem>>, vector<15x512xf32>
    tpu.vector_store %arg4[%c0_19, %c0_20], %18 {strides = array<i32>} : memref<16x512xf32, #tpu.memory_space<vmem>>, vector<15x512xf32>,
    %c0_21 = arith.constant 0 : index
    %c0_22 = arith.constant 0 : index
    %20 = vector.load %arg4[%c0_21, %c0_22] : memref<16x512xf32, #tpu.memory_space<vmem>>, vector<16x512xf32>
    %c0_23 = arith.constant 0 : index
    %c0_24 = arith.constant 0 : index
    %c0_25 = arith.constant 0 : index
    %21 = vector.load %arg3[%c0_23, %c0_24, %c0_25] : memref<1x16x512xf32, #tpu.memory_space<vmem>>, vector<1x16x512xf32>
    %22 = vector.shape_cast %21 : vector<1x16x512xf32> to vector<16x512xf32>
    %23 = vector.shape_cast %20 : vector<16x512xf32> to vector<1x16x512xf32>
    tpu.vector_store %arg3[%c0_23, %c0_24, %c0_25], %23 {strides = array<i32>} : memref<1x16x512xf32, #tpu.memory_space<vmem>>, vector<1x16x512xf32>,
    return
  }
  func.func @transform_0(%arg0: i32) -> (i32, i32, i32) {
    %c0_i32 = arith.constant 0 : i32
    %c0_i32_0 = arith.constant 0 : i32
    %c0_i32_1 = arith.constant 0 : i32
    return %arg0, %c0_i32, %c0_i32_0 : i32, i32, i32
  }
  func.func @transform_1(%arg0: i32) -> (i32, i32, i32) {
    %c0_i32 = arith.constant 0 : i32
    %c0_i32_0 = arith.constant 0 : i32
    %c0_i32_1 = arith.constant 0 : i32
    %c0_i32_2 = arith.constant 0 : i32
    return %c0_i32, %c0_i32_0, %c0_i32_1 : i32, i32, i32
  }
  func.func @transform_2(%arg0: i32) -> (i32, i32, i32) {
    %c0_i32 = arith.constant 0 : i32
    %c0_i32_0 = arith.constant 0 : i32
    %c0_i32_1 = arith.constant 0 : i32
    return %arg0, %c0_i32, %c0_i32_0 : i32, i32, i32
  }
}

</mosaic_0001>

<llo_original>
// kernel: tpu_custom_call.1
$region0: #{tpu_custom_call.1}
  #allocation0 [shape = 'u32[]', space=smem, size = 0x4, offset = 0x4, fixed_abs, tag = 'smem constant byte address 0x4 - core index']
  #allocation1 [shape = 'u32[144,128]{1,0:T(1,128)}', space=vmem, size = 0x12000, scoped, tag = 'internal scratch']
  #allocation2 [shape = 'f32[16,512]{1,0:T(8,128)}', space=vmem, size = 0x8000, scoped, tag = 'scratch operand']
  %s0 = inlined_call_operand.hbm [shape: f32[2,16,64], index: 0, kind: input, shape index: {}]
  %s1 = inlined_call_operand.hbm [shape: f32[3,64,512], index: 1, kind: input, shape index: {}]
  %s2 = inlined_call_operand.hbm [shape: f32[2,16,512], index: 2, kind: output, shape index: {}]
  %s3 = sld [smem:[#allocation0]]
  $region49: #{tpu_custom_call.1} parent=0
    _
  %s5 = ssub.s32 1, %s3
  %s6 = scalar_select 0, %s5, %s3
  $region1: #{tpu_custom_call.1} parent=0
    #allocation3 [shape = 'u8[16384]{0}', space=vmem, size = 0x4000, scoped, tag = 'input window, operand 0']
    #allocation4 [shape = 's32[2]{0}', space=sflag, size = 0x8, scoped, tag = 'scoped memory for tpu_custom_call.1']
    #allocation5 [shape = 's32[2]{0}', space=sflag, size = 0x8, scoped, tag = 'scoped memory for tpu_custom_call.1']
    #allocation6 [shape = 'u8[393216]{0}', space=vmem, size = 0x60000, scoped, tag = 'input window, operand 1, single buffered']
    #allocation7 [shape = 's32[1]{0}', space=sflag, size = 0x4, scoped, tag = 'scoped memory for tpu_custom_call.1']
    #allocation8 [shape = 'u8[65536]{0}', space=vmem, size = 0x10000, scoped, tag = 'output window, operand 0']
    %7 = vsyncpa [#allocation4], 0
    %s8 = scalar_lea.sflag [#allocation4], 1
    %9 = vsyncpa %s8, 0
    %10 = vsyncpa [#allocation7], 0
    %11 = vsyncpa [#allocation5], 0
    %s12 = scalar_lea.sflag [#allocation5], 1
    %13 = vsyncpa %s12, 0
    loop: start=0, step=1, limit=4
    $region2: #{tpu_custom_call.1} parent=1 // loop_pre_header
      _
    $region3: #{tpu_custom_call.1} parent=1 // loop_header
      %s15 = sphi 0, %s19
      %p16 = scmp.ge.s32.totalorder %s15, 4
      %s25 = sphi 0, %s27
      %s28 = sphi 0, %s25
      %s29 = sphi 0, %s28
      %s45 = sphi 0, %s29
      %s49 = sphi 0, %s49
      %s51 = sphi 0, %s49
      %s52 = sphi 0, %s51
      %s66 = sphi 0, %s52
      %s72 = sphi 0, %s74
      %s75 = sphi 0, %s72
      %s76 = sphi 0, %s75
      %s92 = sphi 0, %s76
    $region4: #{tpu_custom_call.1} parent=1 // loop_header_branch
      %18 = sbr.rel (%p16) target = $region8
    $region5: #{tpu_custom_call.1} parent=1 // loop_body
      %s20 = ssub.s32 %s15, 1
      %s21 = ssub.s32 %s15, 2
      %s22 = sadd.s32 %s15, 1
      %s23 = ssub.s32 %s15, %s22
      %p24 = scmp.eq.s32.totalorder %s23, 0
      %s26 = sadd.s32 %s25, 1
      %s27 = scalar_select %p24, %s25, %s26
      %p30 = pneg %p24
      %p31 = scmp.eq.s32.totalorder %s15, 1
      %p32 = por %p30, %p31
      %p33 = scmp.ne.s32.totalorder %s25, %s28
      %p34 = scmp.eq.s32.totalorder %s15, 0
      %p35 = por %p33, %p34
      %p36 = scmp.ne.s32.totalorder %s25, %s28
      %p37 = scmp.eq.s32.totalorder %s20, 1
      %p38 = por %p36, %p37
      %p39 = scmp.ne.s32.totalorder %s28, %s29
      %p40 = scmp.eq.s32.totalorder %s20, 0
      %p41 = por %p39, %p40
      %p42 = scmp.ne.s32.totalorder %s28, %s29
      %p43 = scmp.eq.s32.totalorder %s21, 1
      %p44 = por %p42, %p43
      %p46 = scmp.ne.s32.totalorder %s29, %s45
      %p47 = scmp.eq.s32.totalorder %s21, 0
      %p48 = por %p46, %p47
      %s50 = sadd.s32 %s49, 1
      %p53 = scmp.eq.s32.totalorder %s15, 1
      %p54 = scmp.ne.s32.totalorder %s49, %s51
      %p55 = scmp.eq.s32.totalorder %s15, 0
      %p56 = por %p54, %p55
      %p57 = scmp.ne.s32.totalorder %s49, %s51
      %p58 = scmp.eq.s32.totalorder %s20, 1
      %p59 = por %p57, %p58
      %p60 = scmp.ne.s32.totalorder %s51, %s52
      %p61 = scmp.eq.s32.totalorder %s20, 0
      %p62 = por %p60, %p61
      %p63 = scmp.ne.s32.totalorder %s51, %s52
      %p64 = scmp.eq.s32.totalorder %s21, 1
      %p65 = por %p63, %p64
      %p67 = scmp.ne.s32.totalorder %s52, %s66
      %p68 = scmp.eq.s32.totalorder %s21, 0
      %p69 = por %p67, %p68
      %s70 = ssub.s32 %s15, %s22
      %p71 = scmp.eq.s32.totalorder %s70, 0
      %s73 = sadd.s32 %s72, 1
      %s74 = scalar_select %p71, %s72, %s73
      %p77 = pneg %p71
      %p78 = scmp.eq.s32.totalorder %s15, 1
      %p79 = por %p77, %p78
      %p80 = scmp.ne.s32.totalorder %s72, %s75
      %p81 = scmp.eq.s32.totalorder %s15, 0
      %p82 = por %p80, %p81
      %p83 = scmp.ne.s32.totalorder %s72, %s75
      %p84 = scmp.eq.s32.totalorder %s20, 1
      %p85 = por %p83, %p84
      %p86 = scmp.ne.s32.totalorder %s75, %s76
      %p87 = scmp.eq.s32.totalorder %s20, 0
      %p88 = por %p86, %p87
      %p89 = scmp.ne.s32.totalorder %s75, %s76
      %p90 = scmp.eq.s32.totalorder %s21, 1
      %p91 = por %p89, %p90
      %p93 = scmp.ne.s32.totalorder %s76, %s92
      %p94 = scmp.eq.s32.totalorder %s21, 0
      %p95 = por %p93, %p94
      %p96 = scmp.le.s32.totalorder 1, %s15
      %p97 = scmp.lt.s32.totalorder %s15, 3
      %p98 = pnand %p96, %p97
      %p99 = pneg %p98
      // Predicated region
      $region9: #{tpu_custom_call.1} parent=5 // pred_check
        _
      $region10: #{tpu_custom_call.1} parent=5 // pred_check_branch
        %101 = sbr.rel (%p98) target = $region12
      $region11: #{tpu_custom_call.1} parent=5 // pred_region
        %s102 = ssub.s32 %s15, 1
        // Predicated region
        $region13: #{tpu_custom_call.1} parent=11 // pred_check
          %p103 = pneg %p62
        $region14: #{tpu_custom_call.1} parent=11 // pred_check_branch
          %105 = sbr.rel (%p103) target = $region16
        $region15: #{tpu_custom_call.1} parent=11 // pred_region
          %s107 = ssub.s32 12288, 12288
          %108 = vsyncadd [#allocation7], %s107
          %s109 = sshll.u32 [#allocation6], 4
          %s110 = int_to_ptr.vmem [resolvable:$true] %s109
          %115 = dma.hbm_to_vmem [thread:$0]  %s1, 12288, %s110, [#allocation7], 512, 512, 32
        $region16: #{tpu_custom_call.1} parent=11 // pred_fallthru
          _
      $region12: #{tpu_custom_call.1} parent=5 // pred_fallthru
        _
      %p116 = scmp.lt.s32.totalorder %s15, 2
      // Predicated region
      $region17: #{tpu_custom_call.1} parent=5 // pred_check
        %p117 = pneg %p116
      $region18: #{tpu_custom_call.1} parent=5 // pred_check_branch
        %119 = sbr.rel (%p117) target = $region20
      $region19: #{tpu_custom_call.1} parent=5 // pred_region
        // Predicated region
        $region21: #{tpu_custom_call.1} parent=19 // pred_check
          %p120 = pneg %p35
        $region22: #{tpu_custom_call.1} parent=19 // pred_check_branch
          %122 = sbr.rel (%p120) target = $region24
        $region23: #{tpu_custom_call.1} parent=19 // pred_region
          %s123 = sand.u32 %s25, 1
          %s124 = scalar_lea.sflag [#allocation4], %s123
          %s125 = sand.u32 %s25, 1
          %s126 = smul.addr %s125, 16
          %s127 = scalar_lea.vmem [#allocation3], %s126
          %s129 = ssub.s32 256, 256
          %130 = vsyncadd %s124, %s129
          %s131 = smul.addr %s15, 2
          %s132 = smul.addr %s131, 128
          %s133 = scalar_lea.hbm %s0, %s132
          %s134 = sshll.u32 %s127, 4
          %s135 = int_to_ptr.vmem [resolvable:$true] %s134
          %140 = dma.hbm_to_vmem [thread:$0]  %s133, 256, %s135, %s124, 128, 128, 8
        $region24: #{tpu_custom_call.1} parent=19 // pred_fallthru
          _
      $region20: #{tpu_custom_call.1} parent=5 // pred_fallthru
        _
      %p141 = scmp.le.s32.totalorder 1, %s15
      %p142 = scmp.lt.s32.totalorder %s15, 3
      %p143 = pnand %p141, %p142
      %p144 = pneg %p143
      // Predicated region
      $region25: #{tpu_custom_call.1} parent=5 // pred_check
        _
      $region26: #{tpu_custom_call.1} parent=5 // pred_check_branch
        %146 = sbr.rel (%p143) target = $region28
      $region27: #{tpu_custom_call.1} parent=5 // pred_region
        %s147 = ssub.s32 %s15, 1
        %s148 = sand.u32 %s28, 1
        %s149 = scalar_lea.sflag [#allocation4], %s148
        %s150 = sand.u32 %s28, 1
        %s151 = smul.addr %s150, 16
        %s152 = scalar_lea.vmem [#allocation3], %s151
        // Predicated region
        $region29: #{tpu_custom_call.1} parent=27 // pred_check
          %p153 = pneg %p41
        $region30: #{tpu_custom_call.1} parent=27 // pred_check_branch
          %155 = sbr.rel (%p153) target = $region32
        $region31: #{tpu_custom_call.1} parent=27 // pred_region
          %156 = dma.done %s149, 256
        $region32: #{tpu_custom_call.1} parent=27 // pred_fallthru
          _
        // Predicated region
        $region33: #{tpu_custom_call.1} parent=27 // pred_check
          %p157 = pneg %p62
        $region34: #{tpu_custom_call.1} parent=27 // pred_check_branch
          %159 = sbr.rel (%p157) target = $region36
        $region35: #{tpu_custom_call.1} parent=27 // pred_region
          %160 = dma.done [#allocation7], 12288
        $region36: #{tpu_custom_call.1} parent=27 // pred_fallthru
          _
        %s161 = sand.u32 %s28, 1
        %s162 = scalar_lea.sflag [#allocation4], %s161
        %s163 = sand.u32 %s28, 1
        %s164 = smul.addr %s163, 16
        %s165 = scalar_lea.vmem [#allocation3], %s164
        %p166 = pneg %p41
        %p167 = pneg %p38
        %p168 = pneg %p62
        %p169 = pneg %p59
        %p170 = pneg %p88
        %p171 = pneg %p85
        %s172 = sand.u32 %s75, 1
        %s173 = scalar_lea.sflag [#allocation5], %s172
        %s174 = sand.u32 %s75, 1
        %s175 = smul.addr %s174, 64
        %s176 = scalar_lea.vmem [#allocation8], %s175
        %v177 = vld [vmem:[%s152] sm:$0xff]
        %v178 = vld [vmem:[%s152 + $0x8] sm:$0xff]
        %s179 = scalar_lea.vmem [#allocation6], 256
        %v180 = vld [vmem:[%s179] sm:$0xff]
        %v181 = vld [vmem:[%s179 + $0x8] sm:$0xff]
        %v182 = vld [vmem:[%s179 + $0x10] sm:$0xff]
        %v183 = vld [vmem:[%s179 + $0x18] sm:$0xff]
        %v184 = vld [vmem:[%s179 + $0x20] sm:$0xff]
        %v185 = vld [vmem:[%s179 + $0x28] sm:$0xff]
        %v186 = vld [vmem:[%s179 + $0x30] sm:$0xff]
        %v187 = vld [vmem:[%s179 + $0x38] sm:$0xff]
        %v188 = vld [vmem:[%s179 + $0x40] sm:$0xff]
        %v189 = vld [vmem:[%s179 + $0x48] sm:$0xff]
        %v190 = vld [vmem:[%s179 + $0x50] sm:$0xff]
        %v191 = vld [vmem:[%s179 + $0x58] sm:$0xff]
        %v192 = vld [vmem:[%s179 + $0x60] sm:$0xff]
        %v193 = vld [vmem:[%s179 + $0x68] sm:$0xff]
        %v194 = vld [vmem:[%s179 + $0x70] sm:$0xff]
        %v195 = vld [vmem:[%s179 + $0x78] sm:$0xff]
        %v196 = vld [vmem:[%s179 + $0x80] sm:$0xff]
        %v197 = vld [vmem:[%s179 + $0x88] sm:$0xff]
        %v198 = vld [vmem:[%s179 + $0x90] sm:$0xff]
        %v199 = vld [vmem:[%s179 + $0x98] sm:$0xff]
        %v200 = vld [vmem:[%s179 + $0xa0] sm:$0xff]
        %v201 = vld [vmem:[%s179 + $0xa8] sm:$0xff]
        %v202 = vld [vmem:[%s179 + $0xb0] sm:$0xff]
        %v203 = vld [vmem:[%s179 + $0xb8] sm:$0xff]
        %v204 = vld [vmem:[%s179 + $0xc0] sm:$0xff]
        %v205 = vld [vmem:[%s179 + $0xc8] sm:$0xff]
        %v206 = vld [vmem:[%s179 + $0xd0] sm:$0xff]
        %v207 = vld [vmem:[%s179 + $0xd8] sm:$0xff]
        %v208 = vld [vmem:[%s179 + $0xe0] sm:$0xff]
        %v209 = vld [vmem:[%s179 + $0xe8] sm:$0xff]
        %v210 = vld [vmem:[%s179 + $0xf0] sm:$0xff]
        %v211 = vld [vmem:[%s179 + $0xf8] sm:$0xff]
        %vm212 = vcmask 523264
        %v214 = vsel %vm212, %v177, 0
        %v217 = vsel %vm212, %v178, 0
        %219 = vmatprep.subr.mxu0 %v181
        %220 = vmatpush1.msra.mxu0 %v180
        %221 = vmatprep.subr.mxu0 %v185
        %222 = vmatpush1.msra.mxu0 %v184
        %223 = vmatprep.subr.mxu0 %v189
        %224 = vmatpush1.msra.mxu0 %v188
        %225 = vmatprep.subr.mxu0 %v193
        %226 = vmatpush1.msra.mxu0 %v192
        %227 = vmatprep.subr.mxu0 %v197
        %228 = vmatpush1.msra.mxu0 %v196
        %229 = vmatprep.subr.mxu0 %v201
        %230 = vmatpush1.msra.mxu0 %v200
        %231 = vmatprep.subr.mxu0 %v205
        %232 = vmatpush1.msra.mxu0 %v204
        %233 = vmatprep.subr.mxu0 %v209
        %234 = vmatpush1.msra.mxu0 %v208
        %235 = vmatprep.subr.mxu0 0.0
        %236 = vmatpush1.msra.mxu0 0.0
        %237 = vmatprep.subr.mxu0 0.0
        %238 = vmatpush1.msra.mxu0 0.0
        %239 = vmatprep.subr.mxu0 0.0
        %240 = vmatpush1.msra.mxu0 0.0
        %241 = vmatprep.subr.mxu0 0.0
        %242 = vmatpush1.msra.mxu0 0.0
        %243 = vmatprep.subr.mxu0 0.0
        %244 = vmatpush1.msra.mxu0 0.0
        %245 = vmatprep.subr.mxu0 0.0
        %246 = vmatpush1.msra.mxu0 0.0
        %247 = vmatprep.subr.mxu0 0.0
        %248 = vmatpush1.msra.mxu0 0.0
        %249 = vmatprep.subr.mxu0 0.0
        %250 = vmatpush1.msra.mxu0 0.0
        %251 = vmatprep.subr.mxu0 0.0
        %252 = vmatpush1.msra.mxu0 0.0
        %253 = vmatprep.subr.mxu0 0.0
        %254 = vmatpush1.msra.mxu0 0.0
        %255 = vmatprep.subr.mxu0 0.0
        %256 = vmatpush1.msra.mxu0 0.0
        %257 = vmatprep.subr.mxu0 0.0
        %258 = vmatpush1.msra.mxu0 0.0
        %259 = vmatprep.subr.mxu0 0.0
        %260 = vmatpush1.msra.mxu0 0.0
        %261 = vmatprep.subr.mxu0 0.0
        %262 = vmatpush1.msra.mxu0 0.0
        %263 = vmatprep.subr.mxu0 0.0
        %264 = vmatpush1.msra.mxu0 0.0
        %265 = vmatprep.subr.mxu0 0.0
        %266 = vmatpush1.msra.mxu0 0.0
        %267 = vmatprep.subr.mxu0 0.0
        %268 = vmatpush1.msra.mxu0 0.0
        %269 = vmatprep.subr.mxu0 0.0
        %270 = vmatpush1.msra.mxu0 0.0
        %271 = vmatprep.subr.mxu0 0.0
        %272 = vmatpush1.msra.mxu0 0.0
        %273 = vmatprep.subr.mxu0 0.0
        %274 = vmatpush1.msra.mxu0 0.0
        %275 = vmatprep.subr.mxu0 0.0
        %276 = vmatpush1.msra.mxu0 0.0
        %277 = vmatprep.subr.mxu0 0.0
        %278 = vmatpush1.msra.mxu0 0.0
        %279 = vmatprep.subr.mxu0 0.0
        %280 = vmatpush1.msra.mxu0 0.0
        %281 = vmatprep.subr.mxu0 0.0
        %282 = vmatpush1.msra.mxu0 0.0
        %283 = vmatprep.mubr.f32.mxu0 0.0
        %284 = vmatmul.mubr.f32.gmra.mrb[0].mxu0 %v214
        %v285 = vpop.f32.mrb[0].mxu0
        %v286 = vadd.f32 0.0, %v285
        %v287 = vpop.f32.mrb[0].mxu0
        %v288 = vadd.f32 0.0, %v287
        %289 = vmatprep.mubr.f32.mxu0 0.0
        %290 = vmatmul.mubr.f32.gmra.mrb[0].mxu0 %v217
        %v291 = vpop.f32.mrb[0].mxu0
        %v292 = vadd.f32 0.0, %v291
        %v293 = vpop.f32.mrb[0].mxu0
        %v294 = vadd.f32 0.0, %v293
        %295 = vdwg.mxu0
        %296 = vmatprep.subr.mxu0 %v183
        %297 = vmatpush1.msra.mxu0 %v182
        %298 = vmatprep.subr.mxu0 %v187
        %299 = vmatpush1.msra.mxu0 %v186
        %300 = vmatprep.subr.mxu0 %v191
        %301 = vmatpush1.msra.mxu0 %v190
        %302 = vmatprep.subr.mxu0 %v195
        %303 = vmatpush1.msra.mxu0 %v194
        %304 = vmatprep.subr.mxu0 %v199
        %305 = vmatpush1.msra.mxu0 %v198
        %306 = vmatprep.subr.mxu0 %v203
        %307 = vmatpush1.msra.mxu0 %v202
        %308 = vmatprep.subr.mxu0 %v207
        %309 = vmatpush1.msra.mxu0 %v206
        %310 = vmatprep.subr.mxu0 %v211
        %311 = vmatpush1.msra.mxu0 %v210
        %312 = vmatprep.subr.mxu0 0.0
        %313 = vmatpush1.msra.mxu0 0.0
        %314 = vmatprep.subr.mxu0 0.0
        %315 = vmatpush1.msra.mxu0 0.0
        %316 = vmatprep.subr.mxu0 0.0
        %317 = vmatpush1.msra.mxu0 0.0
        %318 = vmatprep.subr.mxu0 0.0
        %319 = vmatpush1.msra.mxu0 0.0
        %320 = vmatprep.subr.mxu0 0.0
        %321 = vmatpush1.msra.mxu0 0.0
        %322 = vmatprep.subr.mxu0 0.0
        %323 = vmatpush1.msra.mxu0 0.0
        %324 = vmatprep.subr.mxu0 0.0
        %325 = vmatpush1.msra.mxu0 0.0
        %326 = vmatprep.subr.mxu0 0.0
        %327 = vmatpush1.msra.mxu0 0.0
        %328 = vmatprep.subr.mxu0 0.0
        %329 = vmatpush1.msra.mxu0 0.0
        %330 = vmatprep.subr.mxu0 0.0
        %331 = vmatpush1.msra.mxu0 0.0
        %332 = vmatprep.subr.mxu0 0.0
        %333 = vmatpush1.msra.mxu0 0.0
        %334 = vmatprep.subr.mxu0 0.0
        %335 = vmatpush1.msra.mxu0 0.0
        %336 = vmatprep.subr.mxu0 0.0
        %337 = vmatpush1.msra.mxu0 0.0
        %338 = vmatprep.subr.mxu0 0.0
        %339 = vmatpush1.msra.mxu0 0.0
        %340 = vmatprep.subr.mxu0 0.0
        %341 = vmatpush1.msra.mxu0 0.0
        %342 = vmatprep.subr.mxu0 0.0
        %343 = vmatpush1.msra.mxu0 0.0
        %344 = vmatprep.subr.mxu0 0.0
        %345 = vmatpush1.msra.mxu0 0.0
        %346 = vmatprep.subr.mxu0 0.0
        %347 = vmatpush1.msra.mxu0 0.0
        %348 = vmatprep.subr.mxu0 0.0
        %349 = vmatpush1.msra.mxu0 0.0
        %350 = vmatprep.subr.mxu0 0.0
        %351 = vmatpush1.msra.mxu0 0.0
        %352 = vmatprep.subr.mxu0 0.0
        %353 = vmatpush1.msra.mxu0 0.0
        %354 = vmatprep.subr.mxu0 0.0
        %355 = vmatpush1.msra.mxu0 0.0
        %356 = vmatprep.subr.mxu0 0.0
        %357 = vmatpush1.msra.mxu0 0.0
        %358 = vmatprep.subr.mxu0 0.0
        %359 = vmatpush1.msra.mxu0 0.0
        %360 = vmatprep.mubr.f32.mxu0 0.0
        %361 = vmatmul.mubr.f32.gmra.mrb[0].mxu0 %v214
        %v362 = vpop.f32.mrb[0].mxu0
        %v363 = vadd.f32 0.0, %v362
        %v364 = vpop.f32.mrb[0].mxu0
        %v365 = vadd.f32 0.0, %v364
        %366 = vmatprep.mubr.f32.mxu0 0.0
        %367 = vmatmul.mubr.f32.gmra.mrb[0].mxu0 %v217
        %v368 = vpop.f32.mrb[0].mxu0
        %v369 = vadd.f32 0.0, %v368
        %v370 = vpop.f32.mrb[0].mxu0
        %v371 = vadd.f32 0.0, %v370
        %372 = vdwg.mxu0
        %373 = vst [vmem:[#allocation2] sm:$0xff] %v286
        %374 = vst [vmem:[#allocation2 + $0x8] sm:$0xff] %v288
        %375 = vst [vmem:[#allocation2 + $0x10] sm:$0xff] %v363
        %376 = vst [vmem:[#allocation2 + $0x18] sm:$0xff] %v365
        %377 = vst [vmem:[#allocation2 + $0x20] sm:$0xff] %v292
        %378 = vst [vmem:[#allocation2 + $0x28] sm:$0xff] %v294
        %379 = vst [vmem:[#allocation2 + $0x30] sm:$0xff] %v369
        %380 = vst [vmem:[#allocation2 + $0x38] sm:$0xff] %v371
        %v381 = vld [vmem:[#allocation6] sm:$0xff]
        %v382 = vld [vmem:[#allocation6 + $0x8] sm:$0xff]
        %v383 = vld [vmem:[#allocation6 + $0x10] sm:$0xff]
        %v384 = vld [vmem:[#allocation6 + $0x18] sm:$0xff]
        %v385 = vld [vmem:[#allocation6 + $0x20] sm:$0xff]
        %v386 = vld [vmem:[#allocation6 + $0x28] sm:$0xff]
        %v387 = vld [vmem:[#allocation6 + $0x30] sm:$0xff]
        %v388 = vld [vmem:[#allocation6 + $0x38] sm:$0xff]
        %v389 = vld [vmem:[#allocation6 + $0x40] sm:$0xff]
        %v390 = vld [vmem:[#allocation6 + $0x48] sm:$0xff]
        %v391 = vld [vmem:[#allocation6 + $0x50] sm:$0xff]
        %v392 = vld [vmem:[#allocation6 + $0x58] sm:$0xff]
        %v393 = vld [vmem:[#allocation6 + $0x60] sm:$0xff]
        %v394 = vld [vmem:[#allocation6 + $0x68] sm:$0xff]
        %v395 = vld [vmem:[#allocation6 + $0x70] sm:$0xff]
        %v396 = vld [vmem:[#allocation6 + $0x78] sm:$0xff]
        %v397 = vld [vmem:[#allocation6 + $0x80] sm:$0xff]
        %v398 = vld [vmem:[#allocation6 + $0x88] sm:$0xff]
        %v399 = vld [vmem:[#allocation6 + $0x90] sm:$0xff]
        %v400 = vld [vmem:[#allocation6 + $0x98] sm:$0xff]
        %v401 = vld [vmem:[#allocation6 + $0xa0] sm:$0xff]
        %v402 = vld [vmem:[#allocation6 + $0xa8] sm:$0xff]
        %v403 = vld [vmem:[#allocation6 + $0xb0] sm:$0xff]
        %v404 = vld [vmem:[#allocation6 + $0xb8] sm:$0xff]
        %v405 = vld [vmem:[#allocation6 + $0xc0] sm:$0xff]
        %v406 = vld [vmem:[#allocation6 + $0xc8] sm:$0xff]
        %v407 = vld [vmem:[#allocation6 + $0xd0] sm:$0xff]
        %v408 = vld [vmem:[#allocation6 + $0xd8] sm:$0xff]
        %v409 = vld [vmem:[#allocation6 + $0xe0] sm:$0xff]
        %v410 = vld [vmem:[#allocation6 + $0xe8] sm:$0xff]
        %v411 = vld [vmem:[#allocation6 + $0xf0] sm:$0xff]
        %v412 = vld [vmem:[#allocation6 + $0xf8] sm:$0xff]
        %413 = vmatprep.subr.mxu0 %v382
        %414 = vmatpush1.msra.mxu0 %v381
        %415 = vmatprep.subr.mxu0 %v386
        %416 = vmatpush1.msra.mxu0 %v385
        %417 = vmatprep.subr.mxu0 %v390
        %418 = vmatpush1.msra.mxu0 %v389
        %419 = vmatprep.subr.mxu0 %v394
        %420 = vmatpush1.msra.mxu0 %v393
        %421 = vmatprep.subr.mxu0 %v398
        %422 = vmatpush1.msra.mxu0 %v397
        %423 = vmatprep.subr.mxu0 %v402
        %424 = vmatpush1.msra.mxu0 %v401
        %425 = vmatprep.subr.mxu0 %v406
        %426 = vmatpush1.msra.mxu0 %v405
        %427 = vmatprep.subr.mxu0 %v410
        %428 = vmatpush1.msra.mxu0 %v409
        %429 = vmatprep.subr.mxu0 0.0
        %430 = vmatpush1.msra.mxu0 0.0
        %431 = vmatprep.subr.mxu0 0.0
        %432 = vmatpush1.msra.mxu0 0.0
        %433 = vmatprep.subr.mxu0 0.0
        %434 = vmatpush1.msra.mxu0 0.0
        %435 = vmatprep.subr.mxu0 0.0
        %436 = vmatpush1.msra.mxu0 0.0
        %437 = vmatprep.subr.mxu0 0.0
        %438 = vmatpush1.msra.mxu0 0.0
        %439 = vmatprep.subr.mxu0 0.0
        %440 = vmatpush1.msra.mxu0 0.0
        %441 = vmatprep.subr.mxu0 0.0
        %442 = vmatpush1.msra.mxu0 0.0
        %443 = vmatprep.subr.mxu0 0.0
        %444 = vmatpush1.msra.mxu0 0.0
        %445 = vmatprep.subr.mxu0 0.0
        %446 = vmatpush1.msra.mxu0 0.0
        %447 = vmatprep.subr.mxu0 0.0
        %448 = vmatpush1.msra.mxu0 0.0
        %449 = vmatprep.subr.mxu0 0.0
        %450 = vmatpush1.msra.mxu0 0.0
        %451 = vmatprep.subr.mxu0 0.0
        %452 = vmatpush1.msra.mxu0 0.0
        %453 = vmatprep.subr.mxu0 0.0
        %454 = vmatpush1.msra.mxu0 0.0
        %455 = vmatprep.subr.mxu0 0.0
        %456 = vmatpush1.msra.mxu0 0.0
        %457 = vmatprep.subr.mxu0 0.0
        %458 = vmatpush1.msra.mxu0 0.0
        %459 = vmatprep.subr.mxu0 0.0
        %460 = vmatpush1.msra.mxu0 0.0
        %461 = vmatprep.subr.mxu0 0.0
        %462 = vmatpush1.msra.mxu0 0.0
        %463 = vmatprep.subr.mxu0 0.0
        %464 = vmatpush1.msra.mxu0 0.0
        %465 = vmatprep.subr.mxu0 0.0
        %466 = vmatpush1.msra.mxu0 0.0
        %467 = vmatprep.subr.mxu0 0.0
        %468 = vmatpush1.msra.mxu0 0.0
        %469 = vmatprep.subr.mxu0 0.0
        %470 = vmatpush1.msra.mxu0 0.0
        %471 = vmatprep.subr.mxu0 0.0
        %472 = vmatpush1.msra.mxu0 0.0
        %473 = vmatprep.subr.mxu0 0.0
        %474 = vmatpush1.msra.mxu0 0.0
        %475 = vmatprep.subr.mxu0 0.0
        %476 = vmatpush1.msra.mxu0 0.0
        %477 = vmatprep.mubr.f32.mxu0 0.0
        %478 = vmatmul.mubr.f32.gmra.mrb[0].mxu0 %v214
        %v479 = vpop.f32.mrb[0].mxu0
        %v480 = vadd.f32 0.0, %v479
        %v481 = vpop.f32.mrb[0].mxu0
        %v482 = vadd.f32 0.0, %v481
        %483 = vmatprep.mubr.f32.mxu0 0.0
        %484 = vmatmul.mubr.f32.gmra.mrb[0].mxu0 %v217
        %v485 = vpop.f32.mrb[0].mxu0
        %v486 = vadd.f32 0.0, %v485
        %v487 = vpop.f32.mrb[0].mxu0
        %v488 = vadd.f32 0.0, %v487
        %489 = vdwg.mxu0
        %490 = vmatprep.subr.mxu0 %v384
        %491 = vmatpush1.msra.mxu0 %v383
        %492 = vmatprep.subr.mxu0 %v388
        %493 = vmatpush1.msra.mxu0 %v387
        %494 = vmatprep.subr.mxu0 %v392
        %495 = vmatpush1.msra.mxu0 %v391
        %496 = vmatprep.subr.mxu0 %v396
        %497 = vmatpush1.msra.mxu0 %v395
        %498 = vmatprep.subr.mxu0 %v400
        %499 = vmatpush1.msra.mxu0 %v399
        %500 = vmatprep.subr.mxu0 %v404
        %501 = vmatpush1.msra.mxu0 %v403
        %502 = vmatprep.subr.mxu0 %v408
        %503 = vmatpush1.msra.mxu0 %v407
        %504 = vmatprep.subr.mxu0 %v412
        %505 = vmatpush1.msra.mxu0 %v411
        %506 = vmatprep.subr.mxu0 0.0
        %507 = vmatpush1.msra.mxu0 0.0
        %508 = vmatprep.subr.mxu0 0.0
        %509 = vmatpush1.msra.mxu0 0.0
        %510 = vmatprep.subr.mxu0 0.0
        %511 = vmatpush1.msra.mxu0 0.0
        %512 = vmatprep.subr.mxu0 0.0
        %513 = vmatpush1.msra.mxu0 0.0
        %514 = vmatprep.subr.mxu0 0.0
        %515 = vmatpush1.msra.mxu0 0.0
        %516 = vmatprep.subr.mxu0 0.0
        %517 = vmatpush1.msra.mxu0 0.0
        %518 = vmatprep.subr.mxu0 0.0
        %519 = vmatpush1.msra.mxu0 0.0
        %520 = vmatprep.subr.mxu0 0.0
        %521 = vmatpush1.msra.mxu0 0.0
        %522 = vmatprep.subr.mxu0 0.0
        %523 = vmatpush1.msra.mxu0 0.0
        %524 = vmatprep.subr.mxu0 0.0
        %525 = vmatpush1.msra.mxu0 0.0
        %526 = vmatprep.subr.mxu0 0.0
        %527 = vmatpush1.msra.mxu0 0.0
        %528 = vmatprep.subr.mxu0 0.0
        %529 = vmatpush1.msra.mxu0 0.0
        %530 = vmatprep.subr.mxu0 0.0
        %531 = vmatpush1.msra.mxu0 0.0
        %532 = vmatprep.subr.mxu0 0.0
        %533 = vmatpush1.msra.mxu0 0.0
        %534 = vmatprep.subr.mxu0 0.0
        %535 = vmatpush1.msra.mxu0 0.0
        %536 = vmatprep.subr.mxu0 0.0
        %537 = vmatpush1.msra.mxu0 0.0
        %538 = vmatprep.subr.mxu0 0.0
        %539 = vmatpush1.msra.mxu0 0.0
        %540 = vmatprep.subr.mxu0 0.0
        %541 = vmatpush1.msra.mxu0 0.0
        %542 = vmatprep.subr.mxu0 0.0
        %543 = vmatpush1.msra.mxu0 0.0
        %544 = vmatprep.subr.mxu0 0.0
        %545 = vmatpush1.msra.mxu0 0.0
        %546 = vmatprep.subr.mxu0 0.0
        %547 = vmatpush1.msra.mxu0 0.0
        %548 = vmatprep.subr.mxu0 0.0
        %549 = vmatpush1.msra.mxu0 0.0
        %550 = vmatprep.subr.mxu0 0.0
        %551 = vmatpush1.msra.mxu0 0.0
        %552 = vmatprep.subr.mxu0 0.0
        %553 = vmatpush1.msra.mxu0 0.0
        %554 = vmatprep.mubr.f32.mxu0 0.0
        %555 = vmatmul.mubr.f32.gmra.mrb[0].mxu0 %v214
        %v556 = vpop.f32.mrb[0].mxu0
        %v557 = vadd.f32 0.0, %v556
        %v558 = vpop.f32.mrb[0].mxu0
        %v559 = vadd.f32 0.0, %v558
        %560 = vmatprep.mubr.f32.mxu0 0.0
        %561 = vmatmul.mubr.f32.gmra.mrb[0].mxu0 %v217
        %v562 = vpop.f32.mrb[0].mxu0
        %v563 = vadd.f32 0.0, %v562
        %v564 = vpop.f32.mrb[0].mxu0
        %v565 = vadd.f32 0.0, %v564
        %566 = vdwg.mxu0
        %v567 = vld [vmem:[#allocation2] sm:$0xfe]
        %v568 = vld [vmem:[#allocation2 + $0x8] sm:$0xfe]
        %v569 = vld [vmem:[#allocation2 + $0x10] sm:$0xfe]
        %v570 = vld [vmem:[#allocation2 + $0x18] sm:$0xfe]
        %v571 = vld [vmem:[#allocation2 + $0x20] sm:$0xff]
        %v572 = vld [vmem:[#allocation2 + $0x28] sm:$0xff]
        %v573 = vld [vmem:[#allocation2 + $0x30] sm:$0xff]
        %v574 = vld [vmem:[#allocation2 + $0x38] sm:$0xff]
        %vm583 = vcmask 1040384
        %v584 = vrot.slane %v480, 7
        %v585 = vrot.slane %v482, 7
        %v586 = vrot.slane %v557, 7
        %v587 = vrot.slane %v559, 7
        %v588 = vrot.slane %v486, 7
        %v589 = vsel %vm583, %v584, %v588
        %v590 = vrot.slane %v488, 7
        %v591 = vsel %vm583, %v585, %v590
        %v592 = vrot.slane %v563, 7
        %v593 = vsel %vm583, %v586, %v592
        %v594 = vrot.slane %v565, 7
        %v595 = vsel %vm583, %v587, %v594
        %v604 = vadd.f32 %v567, %v584
        %v605 = vadd.f32 %v568, %v585
        %v606 = vadd.f32 %v569, %v586
        %v607 = vadd.f32 %v570, %v587
        %v608 = vadd.f32 %v571, %v589
        %v609 = vadd.f32 %v572, %v591
        %v610 = vadd.f32 %v573, %v593
        %v611 = vadd.f32 %v574, %v595
        %612 = vst [vmem:[#allocation2] sm:$0xfe] %v604
        %613 = vst [vmem:[#allocation2 + $0x8] sm:$0xfe] %v605
        %614 = vst [vmem:[#allocation2 + $0x10] sm:$0xfe] %v606
        %615 = vst [vmem:[#allocation2 + $0x18] sm:$0xfe] %v607
        %616 = vst [vmem:[#allocation2 + $0x20] sm:$0xff] %v608
        %617 = vst [vmem:[#allocation2 + $0x28] sm:$0xff] %v609
        %618 = vst [vmem:[#allocation2 + $0x30] sm:$0xff] %v610
        %619 = vst [vmem:[#allocation2 + $0x38] sm:$0xff] %v611
        %s620 = scalar_lea.vmem [#allocation6], 512
        %v621 = vld [vmem:[%s620] sm:$0xff]
        %v622 = vld [vmem:[%s620 + $0x8] sm:$0xff]
        %v623 = vld [vmem:[%s620 + $0x10] sm:$0xff]
        %v624 = vld [vmem:[%s620 + $0x18] sm:$0xff]
        %v625 = vld [vmem:[%s620 + $0x20] sm:$0xff]
        %v626 = vld [vmem:[%s620 + $0x28] sm:$0xff]
        %v627 = vld [vmem:[%s620 + $0x30] sm:$0xff]
        %v628 = vld [vmem:[%s620 + $0x38] sm:$0xff]
        %v629 = vld [vmem:[%s620 + $0x40] sm:$0xff]
        %v630 = vld [vmem:[%s620 + $0x48] sm:$0xff]
        %v631 = vld [vmem:[%s620 + $0x50] sm:$0xff]
        %v632 = vld [vmem:[%s620 + $0x58] sm:$0xff]
        %v633 = vld [vmem:[%s620 + $0x60] sm:$0xff]
        %v634 = vld [vmem:[%s620 + $0x68] sm:$0xff]
        %v635 = vld [vmem:[%s620 + $0x70] sm:$0xff]
        %v636 = vld [vmem:[%s620 + $0x78] sm:$0xff]
        %v637 = vld [vmem:[%s620 + $0x80] sm:$0xff]
        %v638 = vld [vmem:[%s620 + $0x88] sm:$0xff]
        %v639 = vld [vmem:[%s620 + $0x90] sm:$0xff]
        %v640 = vld [vmem:[%s620 + $0x98] sm:$0xff]
        %v641 = vld [vmem:[%s620 + $0xa0] sm:$0xff]
        %v642 = vld [vmem:[%s620 + $0xa8] sm:$0xff]
        %v643 = vld [vmem:[%s620 + $0xb0] sm:$0xff]
        %v644 = vld [vmem:[%s620 + $0xb8] sm:$0xff]
        %v645 = vld [vmem:[%s620 + $0xc0] sm:$0xff]
        %v646 = vld [vmem:[%s620 + $0xc8] sm:$0xff]
        %v647 = vld [vmem:[%s620 + $0xd0] sm:$0xff]
        %v648 = vld [vmem:[%s620 + $0xd8] sm:$0xff]
        %v649 = vld [vmem:[%s620 + $0xe0] sm:$0xff]
        %v650 = vld [vmem:[%s620 + $0xe8] sm:$0xff]
        %v651 = vld [vmem:[%s620 + $0xf0] sm:$0xff]
        %v652 = vld [vmem:[%s620 + $0xf8] sm:$0xff]
        %653 = vmatprep.subr.mxu0 %v622
        %654 = vmatpush1.msra.mxu0 %v621
        %655 = vmatprep.subr.mxu0 %v626
        %656 = vmatpush1.msra.mxu0 %v625
        %657 = vmatprep.subr.mxu0 %v630
        %658 = vmatpush1.msra.mxu0 %v629
        %659 = vmatprep.subr.mxu0 %v634
        %660 = vmatpush1.msra.mxu0 %v633
        %661 = vmatprep.subr.mxu0 %v638
        %662 = vmatpush1.msra.mxu0 %v637
        %663 = vmatprep.subr.mxu0 %v642
        %664 = vmatpush1.msra.mxu0 %v641
        %665 = vmatprep.subr.mxu0 %v646
        %666 = vmatpush1.msra.mxu0 %v645
        %667 = vmatprep.subr.mxu0 %v650
        %668 = vmatpush1.msra.mxu0 %v649
        %669 = vmatprep.subr.mxu0 0.0
        %670 = vmatpush1.msra.mxu0 0.0
        %671 = vmatprep.subr.mxu0 0.0
        %672 = vmatpush1.msra.mxu0 0.0
        %673 = vmatprep.subr.mxu0 0.0
        %674 = vmatpush1.msra.mxu0 0.0
        %675 = vmatprep.subr.mxu0 0.0
        %676 = vmatpush1.msra.mxu0 0.0
        %677 = vmatprep.subr.mxu0 0.0
        %678 = vmatpush1.msra.mxu0 0.0
        %679 = vmatprep.subr.mxu0 0.0
        %680 = vmatpush1.msra.mxu0 0.0
        %681 = vmatprep.subr.mxu0 0.0
        %682 = vmatpush1.msra.mxu0 0.0
        %683 = vmatprep.subr.mxu0 0.0
        %684 = vmatpush1.msra.mxu0 0.0
        %685 = vmatprep.subr.mxu0 0.0
        %686 = vmatpush1.msra.mxu0 0.0
        %687 = vmatprep.subr.mxu0 0.0
        %688 = vmatpush1.msra.mxu0 0.0
        %689 = vmatprep.subr.mxu0 0.0
        %690 = vmatpush1.msra.mxu0 0.0
        %691 = vmatprep.subr.mxu0 0.0
        %692 = vmatpush1.msra.mxu0 0.0
        %693 = vmatprep.subr.mxu0 0.0
        %694 = vmatpush1.msra.mxu0 0.0
        %695 = vmatprep.subr.mxu0 0.0
        %696 = vmatpush1.msra.mxu0 0.0
        %697 = vmatprep.subr.mxu0 0.0
        %698 = vmatpush1.msra.mxu0 0.0
        %699 = vmatprep.subr.mxu0 0.0
        %700 = vmatpush1.msra.mxu0 0.0
        %701 = vmatprep.subr.mxu0 0.0
        %702 = vmatpush1.msra.mxu0 0.0
        %703 = vmatprep.subr.mxu0 0.0
        %704 = vmatpush1.msra.mxu0 0.0
        %705 = vmatprep.subr.mxu0 0.0
        %706 = vmatpush1.msra.mxu0 0.0
        %707 = vmatprep.subr.mxu0 0.0
        %708 = vmatpush1.msra.mxu0 0.0
        %709 = vmatprep.subr.mxu0 0.0
        %710 = vmatpush1.msra.mxu0 0.0
        %711 = vmatprep.subr.mxu0 0.0
        %712 = vmatpush1.msra.mxu0 0.0
        %713 = vmatprep.subr.mxu0 0.0
        %714 = vmatpush1.msra.mxu0 0.0
        %715 = vmatprep.subr.mxu0 0.0
        %716 = vmatpush1.msra.mxu0 0.0
        %717 = vmatprep.mubr.f32.mxu0 0.0
        %718 = vmatmul.mubr.f32.gmra.mrb[0].mxu0 %v214
        %v719 = vpop.f32.mrb[0].mxu0
        %v720 = vadd.f32 0.0, %v719
        %v721 = vpop.f32.mrb[0].mxu0
        %v722 = vadd.f32 0.0, %v721
        %723 = vmatprep.mubr.f32.mxu0 0.0
        %724 = vmatmul.mubr.f32.gmra.mrb[0].mxu0 %v217
        %v725 = vpop.f32.mrb[0].mxu0
        %v726 = vadd.f32 0.0, %v725
        %v727 = vpop.f32.mrb[0].mxu0
        %v728 = vadd.f32 0.0, %v727
        %729 = vdwg.mxu0
        %730 = vmatprep.subr.mxu0 %v624
        %731 = vmatpush1.msra.mxu0 %v623
        %732 = vmatprep.subr.mxu0 %v628
        %733 = vmatpush1.msra.mxu0 %v627
        %734 = vmatprep.subr.mxu0 %v632
        %735 = vmatpush1.msra.mxu0 %v631
        %736 = vmatprep.subr.mxu0 %v636
        %737 = vmatpush1.msra.mxu0 %v635
        %738 = vmatprep.subr.mxu0 %v640
        %739 = vmatpush1.msra.mxu0 %v639
        %740 = vmatprep.subr.mxu0 %v644
        %741 = vmatpush1.msra.mxu0 %v643
        %742 = vmatprep.subr.mxu0 %v648
        %743 = vmatpush1.msra.mxu0 %v647
        %744 = vmatprep.subr.mxu0 %v652
        %745 = vmatpush1.msra.mxu0 %v651
        %746 = vmatprep.subr.mxu0 0.0
        %747 = vmatpush1.msra.mxu0 0.0
        %748 = vmatprep.subr.mxu0 0.0
        %749 = vmatpush1.msra.mxu0 0.0
        %750 = vmatprep.subr.mxu0 0.0
        %751 = vmatpush1.msra.mxu0 0.0
        %752 = vmatprep.subr.mxu0 0.0
        %753 = vmatpush1.msra.mxu0 0.0
        %754 = vmatprep.subr.mxu0 0.0
        %755 = vmatpush1.msra.mxu0 0.0
        %756 = vmatprep.subr.mxu0 0.0
        %757 = vmatpush1.msra.mxu0 0.0
        %758 = vmatprep.subr.mxu0 0.0
        %759 = vmatpush1.msra.mxu0 0.0
        %760 = vmatprep.subr.mxu0 0.0
        %761 = vmatpush1.msra.mxu0 0.0
        %762 = vmatprep.subr.mxu0 0.0
        %763 = vmatpush1.msra.mxu0 0.0
        %764 = vmatprep.subr.mxu0 0.0
        %765 = vmatpush1.msra.mxu0 0.0
        %766 = vmatprep.subr.mxu0 0.0
        %767 = vmatpush1.msra.mxu0 0.0
        %768 = vmatprep.subr.mxu0 0.0
        %769 = vmatpush1.msra.mxu0 0.0
        %770 = vmatprep.subr.mxu0 0.0
        %771 = vmatpush1.msra.mxu0 0.0
        %772 = vmatprep.subr.mxu0 0.0
        %773 = vmatpush1.msra.mxu0 0.0
        %774 = vmatprep.subr.mxu0 0.0
        %775 = vmatpush1.msra.mxu0 0.0
        %776 = vmatprep.subr.mxu0 0.0
        %777 = vmatpush1.msra.mxu0 0.0
        %778 = vmatprep.subr.mxu0 0.0
        %779 = vmatpush1.msra.mxu0 0.0
        %780 = vmatprep.subr.mxu0 0.0
        %781 = vmatpush1.msra.mxu0 0.0
        %782 = vmatprep.subr.mxu0 0.0
        %783 = vmatpush1.msra.mxu0 0.0
        %784 = vmatprep.subr.mxu0 0.0
        %785 = vmatpush1.msra.mxu0 0.0
        %786 = vmatprep.subr.mxu0 0.0
        %787 = vmatpush1.msra.mxu0 0.0
        %788 = vmatprep.subr.mxu0 0.0
        %789 = vmatpush1.msra.mxu0 0.0
        %790 = vmatprep.subr.mxu0 0.0
        %791 = vmatpush1.msra.mxu0 0.0
        %792 = vmatprep.subr.mxu0 0.0
        %793 = vmatpush1.msra.mxu0 0.0
        %794 = vmatprep.mubr.f32.mxu0 0.0
        %795 = vmatmul.mubr.f32.gmra.mrb[0].mxu0 %v214
        %v796 = vpop.f32.mrb[0].mxu0
        %v797 = vadd.f32 0.0, %v796
        %v798 = vpop.f32.mrb[0].mxu0
        %v799 = vadd.f32 0.0, %v798
        %800 = vmatprep.mubr.f32.mxu0 0.0
        %801 = vmatmul.mubr.f32.gmra.mrb[0].mxu0 %v217
        %v802 = vpop.f32.mrb[0].mxu0
        %v803 = vadd.f32 0.0, %v802
        %v804 = vpop.f32.mrb[0].mxu0
        %v805 = vadd.f32 0.0, %v804
        %806 = vdwg.mxu0
        %v807 = vld [vmem:[#allocation2] sm:$0xff]
        %v808 = vld [vmem:[#allocation2 + $0x8] sm:$0xff]
        %v809 = vld [vmem:[#allocation2 + $0x10] sm:$0xff]
        %v810 = vld [vmem:[#allocation2 + $0x18] sm:$0xff]
        %v811 = vld [vmem:[#allocation2 + $0x20] sm:$0x7f]
        %v812 = vld [vmem:[#allocation2 + $0x28] sm:$0x7f]
        %v813 = vld [vmem:[#allocation2 + $0x30] sm:$0x7f]
        %v814 = vld [vmem:[#allocation2 + $0x38] sm:$0x7f]
        %vm823 = vcmask 1046528
        %v824 = vrot.slane %v720, 1
        %v825 = vrot.slane %v726, 1
        %v826 = vsel %vm823, %v824, %v825
        %v827 = vrot.slane %v722, 1
        %v828 = vrot.slane %v728, 1
        %v829 = vsel %vm823, %v827, %v828
        %v830 = vrot.slane %v797, 1
        %v831 = vrot.slane %v803, 1
        %v832 = vsel %vm823, %v830, %v831
        %v833 = vrot.slane %v799, 1
        %v834 = vrot.slane %v805, 1
        %v835 = vsel %vm823, %v833, %v834
        %v844 = vadd.f32 %v807, %v826
        %v845 = vadd.f32 %v808, %v829
        %v846 = vadd.f32 %v809, %v832
        %v847 = vadd.f32 %v810, %v835
        %v848 = vadd.f32 %v811, %v825
        %v849 = vadd.f32 %v812, %v828
        %v850 = vadd.f32 %v813, %v831
        %v851 = vadd.f32 %v814, %v834
        %852 = vst [vmem:[#allocation2] sm:$0xff] %v844
        %853 = vst [vmem:[#allocation2 + $0x8] sm:$0xff] %v845
        %854 = vst [vmem:[#allocation2 + $0x10] sm:$0xff] %v846
        %855 = vst [vmem:[#allocation2 + $0x18] sm:$0xff] %v847
        %856 = vst [vmem:[#allocation2 + $0x20] sm:$0x7f] %v848
        %857 = vst [vmem:[#allocation2 + $0x28] sm:$0x7f] %v849
        %858 = vst [vmem:[#allocation2 + $0x30] sm:$0x7f] %v850
        %859 = vst [vmem:[#allocation2 + $0x38] sm:$0x7f] %v851
        %v860 = vld [vmem:[#allocation2] sm:$0xff]
        %v861 = vld [vmem:[#allocation2 + $0x8] sm:$0xff]
        %v862 = vld [vmem:[#allocation2 + $0x10] sm:$0xff]
        %v863 = vld [vmem:[#allocation2 + $0x18] sm:$0xff]
        %v864 = vld [vmem:[#allocation2 + $0x20] sm:$0xff]
        %v865 = vld [vmem:[#allocation2 + $0x28] sm:$0xff]
        %v866 = vld [vmem:[#allocation2 + $0x30] sm:$0xff]
        %v867 = vld [vmem:[#allocation2 + $0x38] sm:$0xff]
        %868 = vst [vmem:[%s176] sm:$0xff] %v860
        %869 = vst [vmem:[%s176 + $0x8] sm:$0xff] %v861
        %870 = vst [vmem:[%s176 + $0x10] sm:$0xff] %v862
        %871 = vst [vmem:[%s176 + $0x18] sm:$0xff] %v863
        %872 = vst [vmem:[%s176 + $0x20] sm:$0xff] %v864
        %873 = vst [vmem:[%s176 + $0x28] sm:$0xff] %v865
        %874 = vst [vmem:[%s176 + $0x30] sm:$0xff] %v866
        %875 = vst [vmem:[%s176 + $0x38] sm:$0xff] %v867
        %s876 = sand.u32 %s75, 1
        %s877 = scalar_lea.sflag [#allocation5], %s876
        %s878 = sand.u32 %s75, 1
        %s879 = smul.addr %s878, 64
        %s880 = scalar_lea.vmem [#allocation8], %s879
        // Predicated region
        $region37: #{tpu_custom_call.1} parent=27 // pred_check
          %p881 = pneg %p85
        $region38: #{tpu_custom_call.1} parent=27 // pred_check_branch
          %883 = sbr.rel (%p881) target = $region40
        $region39: #{tpu_custom_call.1} parent=27 // pred_region
          %s885 = ssub.s32 1024, 1024
          %886 = vsyncadd %s877, %s885
          %s887 = smul.addr %s20, 8
          %s888 = smul.addr %s887, 128
          %s889 = scalar_lea.hbm %s2, %s888
          %s890 = sshll.u32 %s880, 4
          %s891 = int_to_ptr.vmem [resolvable:$true] %s890
          %896 = dma.vmem_to_hbm [thread:$0]  %s891, 1024, %s889, %s877, 512, 512, 32
        $region40: #{tpu_custom_call.1} parent=27 // pred_fallthru
          _
      $region28: #{tpu_custom_call.1} parent=5 // pred_fallthru
        _
      %p897 = scmp.le.s32.totalorder 2, %s15
      // Predicated region
      $region41: #{tpu_custom_call.1} parent=5 // pred_check
        %p898 = pneg %p897
      $region42: #{tpu_custom_call.1} parent=5 // pred_check_branch
        %900 = sbr.rel (%p898) target = $region44
      $region43: #{tpu_custom_call.1} parent=5 // pred_region
        %s901 = ssub.s32 %s15, 2
        // Predicated region
        $region45: #{tpu_custom_call.1} parent=43 // pred_check
          %p902 = pneg %p91
        $region46: #{tpu_custom_call.1} parent=43 // pred_check_branch
          %904 = sbr.rel (%p902) target = $region48
        $region47: #{tpu_custom_call.1} parent=43 // pred_region
          %s905 = sand.u32 %s76, 1
          %s906 = scalar_lea.sflag [#allocation5], %s905
          %s907 = sand.u32 %s76, 1
          %s908 = smul.addr %s907, 64
          %s909 = scalar_lea.vmem [#allocation8], %s908
          %910 = dma.done %s906, 1024
        $region48: #{tpu_custom_call.1} parent=43 // pred_fallthru
          _
      $region44: #{tpu_custom_call.1} parent=5 // pred_fallthru
        _
    $region6: #{tpu_custom_call.1} parent=1 // loop_footer
      %s19 = sadd.s32 1, %s15
    $region7: #{tpu_custom_call.1} parent=1 // loop_footer_branch
      %14 = sbr.rel target = $region3
    $region8: #{tpu_custom_call.1} parent=1 // loop_exit
      _
    %911 = vsyncpa [#allocation4], 1
    %s912 = scalar_lea.sflag [#allocation4], 1
    %913 = vsyncpa %s912, 1
    %914 = vsyncpa [#allocation7], 1
    %915 = vsyncpa [#allocation5], 1
    %s916 = scalar_lea.sflag [#allocation5], 1
    %917 = vsyncpa %s916, 1

</llo_original>
